<compile_context>
chip_gen: v7x
topology: tpu7x:2x2x1
jax: 0.10.0
libtpu: 0.0.40
codegen_flags: <defaults>
</compile_context>

<pallas_src>
import numpy as np
import jax
import jax.numpy as jnp
from jax.experimental import pallas as pl
from jax.experimental.pallas import tpu as pltpu


def _round_up(x, m):
    return (x + m - 1) // m * m


def _make_invconv_kernel(Na, Nb, Nc, K, C_pad, tnk_pad, Ltile, H):
    KC = K * C_pad
    inv_k = 1.0 / K
    lin_std2 = (K * K - 1) / 12.0          # linear_std ** 2
    lin_mean = (K - 1) / 2.0
    inv_lin_std2 = (1.0 / lin_std2) if K > 1 else 0.0   # K=1 is degenerate in torch too
    Nc_rows = tnk_pad - Na - Nb            # group C rows incl. tnk padding rows

    def kernel(xm_ref, xh_ref, w_ref, b_ref, out_ref, stats_ref):
        # ---- halo'd slab: (C_pad, Ltile + H) = main tile ++ halo of next tile
        xslab = jnp.concatenate([xm_ref[0], xh_ref[0]], axis=1)

        # ---- K shifted windows: xs[m][c, t] = x[c, t0 + t + m] (static crops)
        xs = [xslab[:, m:m + Ltile] for m in range(K)]

        # ---- per-window statistics (cheap VPU work on (C_pad, Ltile)) -------
        # NOTE: E[x^2] - mean^2 matches the torch module's formula exactly
        # (same cancellation behaviour), clamped at 0 like torch.clamp.
        s1 = xs[0]
        s2 = xs[0] * xs[0]
        slin = jnp.zeros_like(xs[0])
        for m in range(1, K):
            xm = xs[m]
            s1 = s1 + xm
            s2 = s2 + xm * xm
            slin = slin + float(m) * xm

        means = s1 * inv_k
        var = jnp.maximum(s2 * inv_k - means * means, 0.0)
        norms = jnp.sqrt(var * K)                               # stds * sqrt(K)
        # one exact reciprocal per (c, t); zero norm -> zero contribution
        # (matches torch's x / inf == 0 convention).
        inv_n = jnp.where(norms != 0.0,
                          1.0 / jnp.where(norms != 0.0, norms, 1.0), 0.0)

        lin_coef = (slin * inv_k - lin_mean * means) * inv_lin_std2
        lin_offset = means - lin_coef * lin_mean
        lin_norms = jnp.sqrt(
            jnp.maximum(K * (var - lin_coef * lin_coef * lin_std2), 0.0))
        inv_l = jnp.where(lin_norms != 0.0,
                          1.0 / jnp.where(lin_norms != 0.0, lin_norms, 1.0), 0.0)

        W = w_ref[...]          # (tnk_pad, KC + 2*C_pad) packed augmented weights
        bias = b_ref[...]       # (tnk_pad, 1)

        parts = []

        # ---- group A: raw correlation (single MXU dot) -----------------------
        if Na > 0:
            slab_a = jnp.concatenate(xs, axis=0)                       # (KC, Lt)
            pa = jnp.dot(W[:Na, :KC], slab_a,
                         preferred_element_type=jnp.float32) + bias[:Na]
            parts.append(pa)

        # ---- group B: mean-normalized, correction fused into the dot ---------
        if Nb > 0:
            slab_b = jnp.concatenate(
                [x * inv_n for x in xs] + [-(means * inv_n)], axis=0)  # (KC+C, Lt)
            pb = jnp.dot(W[Na:Na + Nb, :KC + C_pad], slab_b,
                         preferred_element_type=jnp.float32) + bias[Na:Na + Nb]
            parts.append(pb)

        # ---- group C: linear-detrended, both corrections fused ---------------
        if Nc > 0:
            slab_c = jnp.concatenate(
                [x * inv_l for x in xs]
                + [-(lin_coef * inv_l), -(lin_offset * inv_l)], axis=0)  # (KC+2C, Lt)
            pc = jnp.dot(W[Na + Nb:, :], slab_c,
                         preferred_element_type=jnp.float32) + bias[Na + Nb:]
            parts.append(pc)
        elif Nc_rows > 0:
            parts.append(jnp.zeros((Nc_rows, Ltile), jnp.float32))

        # ---- single full-tile (sublane-aligned) stores ------------------------
        out_ref[0, :, :] = jnp.concatenate(parts, axis=0)
        stats_ref[0, :, :] = jnp.concatenate(
            [norms, means, lin_norms, lin_coef, lin_offset], axis=0)

    return kernel


def inv_conv1d_forward(x, weight, bias_full, out_channels, *, ltile=1024):
    """x: (B, C, L) f32; weight: (tnk, C, K) f32; bias_full: (tnk, 1) f32
    (bias entries for groups with bias_mask=False must be zero).

    Returns (output (B, tnk, Lout), stats (B, 1, 5, C, Lout)) like the torch module.
    `ltile`: lane-dense length tile (rounded to a multiple of 128).  1024 fits
    comfortably on v5e/v6e (128 MiB VMEM) and v7x (64 MiB).
    """
    x = jnp.asarray(x, jnp.float32)
    weight = jnp.asarray(weight, jnp.float32)
    B, C, L = x.shape
    tnk, C2, K = weight.shape
    assert C == C2
    Na, Nb, Nc = out_channels
    assert Na + Nb + Nc == tnk
    Lout = L - K + 1            # padding=0, stride=1, dilation=1
    assert Lout > 0

    # Sublane-aligned channel / output-row padding.
    C_pad = _round_up(C, 8)
    tnk_pad = _round_up(tnk, 8)

    # Halo block (lane-aligned) and length tiling.
    H = max(_round_up(K - 1, 128), 128)
    Ltile = max(_round_up(min(ltile, _round_up(Lout, H)), H), H)
    Lout_pad = _round_up(Lout, Ltile)
    n_t = Lout_pad // Ltile
    L_pad = Lout_pad + H
    x_pad = jnp.pad(x, ((0, 0), (0, C_pad - C), (0, L_pad - L)))

    # Packed weights: row order m*C_pad + c matches the in-kernel im2col
    # (concat over taps of (C_pad, Ltile) windows), plus fused correction columns.
    w_pad = jnp.pad(weight, ((0, tnk_pad - tnk), (0, C_pad - C), (0, 0)))
    w_flat = jnp.transpose(w_pad, (0, 2, 1)).reshape(tnk_pad, K * C_pad)
    taps = jnp.arange(K, dtype=jnp.float32)
    w_sum = jnp.sum(w_pad, axis=-1)                 # (tnk_pad, C_pad)  sum_m W[o,c,m]
    w_lin = jnp.sum(w_pad * taps, axis=-1)          # (tnk_pad, C_pad)  sum_m m*W[o,c,m]

    KC = K * C_pad
    W_pack = jnp.zeros((tnk_pad, KC + 2 * C_pad), jnp.float32)
    W_pack = W_pack.at[:, :KC].set(w_flat)
    if Nb > 0:
        W_pack = W_pack.at[Na:Na + Nb, KC:KC + C_pad].set(w_sum[Na:Na + Nb])
    if Nc > 0:
        W_pack = W_pack.at[Na + Nb:tnk, KC:KC + C_pad].set(w_lin[Na + Nb:tnk])
        W_pack = W_pack.at[Na + Nb:tnk, KC + C_pad:].set(w_sum[Na + Nb:tnk])

    bias2 = jnp.zeros((tnk_pad, 1), jnp.float32)
    bias2 = bias2.at[:tnk].set(jnp.asarray(bias_full, jnp.float32).reshape(tnk, 1))

    kernel = _make_invconv_kernel(Na, Nb, Nc, K, C_pad, tnk_pad, Ltile, H)

    out_pad, stats_pad = pl.pallas_call(
        kernel,
        out_shape=(
            jax.ShapeDtypeStruct((B, tnk_pad, Lout_pad), jnp.float32),
            jax.ShapeDtypeStruct((B, 5 * C_pad, Lout_pad), jnp.float32),
        ),
        grid_spec=pltpu.PrefetchScalarGridSpec(
            num_scalar_prefetch=0,
            grid=(B, n_t),
            in_specs=[
                # main length tile of the signal
                pl.BlockSpec((1, C_pad, Ltile), lambda b, t: (b, 0, t)),
                # halo: first H columns of the NEXT tile (same array, overlap)
                pl.BlockSpec((1, C_pad, H),
                             lambda b, t: (b, 0, (t + 1) * (Ltile // H))),
                # grid-invariant packed weights and bias
                pl.BlockSpec((tnk_pad, KC + 2 * C_pad), lambda b, t: (0, 0)),
                pl.BlockSpec((tnk_pad, 1), lambda b, t: (0, 0)),
            ],
            out_specs=[
                pl.BlockSpec((1, tnk_pad, Ltile), lambda b, t: (b, 0, t)),
                pl.BlockSpec((1, 5 * C_pad, Ltile), lambda b, t: (b, 0, t)),
            ],
        ),
        compiler_params=pltpu.CompilerParams(
            # batch and length tiles are fully independent (v7x 2-TC sharding)
            dimension_semantics=("parallel", "parallel"),
            vmem_limit_bytes=32 * 1024 * 1024,
        ),
    )(x_pad, x_pad, W_pack, bias2)

    out = out_pad[:, :tnk, :Lout]
    stats = stats_pad.reshape(B, 5, C_pad, Lout_pad)[:, :, :C, :Lout][:, None]
    # match torch return: (output, means_stds_ltn_ltc_lto) with shape (B,1,5,C,Lout)
    return out, stats


def _reference_forward(x, weight, bias_full, out_channels):
    """Pure-JAX reference (same math, vectorized differently) for verification."""
    B, C, L = x.shape
    tnk, _, K = weight.shape
    Lout = L - K + 1
    Na, Nb, Nc = out_channels
    idx = jnp.arange(Lout)[:, None] + jnp.arange(K)[None, :]
    win = x[:, :, idx]                                  # (B, C, Lout, K)
    prod = jnp.einsum('ocm,bclm->bocl', weight, win)    # (B, tnk, C, Lout)
    means = win.mean(-1)
    var = jnp.maximum((win ** 2).mean(-1) - means ** 2, 0.0)
    stds = jnp.sqrt(var)
    norms = stds * np.sqrt(K)
    safe_norms = jnp.where(norms != 0.0, norms, jnp.inf)
    lin_std2 = (K * K - 1) / 12.0
    lin_mean = (K - 1) / 2.0
    taps = jnp.arange(K, dtype=jnp.float32)
    lin_coef = ((win * taps).sum(-1) / K - lin_mean * means) / lin_std2
    lin_offset = means - lin_coef * lin_mean
    lin_norms = jnp.sqrt(jnp.maximum(K * (var - lin_coef ** 2 * lin_std2), 0.0))
    safe_lin_norms = jnp.where(lin_norms != 0.0, lin_norms, jnp.inf)

    Pa = prod[:, :Na].sum(2) + bias_full[:Na][None]
    Wb = weight[Na:Na + Nb]
    Pb = (prod[:, Na:Na + Nb] - Wb.sum(-1)[None, :, :, None] * means[:, None])
    Pb = (Pb / safe_norms[:, None]).sum(2) + bias_full[Na:Na + Nb][None]
    Wc = weight[Na + Nb:]
    Pc = prod[:, Na + Nb:] - ((Wc * taps).sum(-1)[None, :, :, None] * lin_coef[:, None]
                              + Wc.sum(-1)[None, :, :, None] * lin_offset[:, None])
    Pc = (Pc / safe_lin_norms[:, None]).sum(2) + bias_full[Na + Nb:][None]
    out = jnp.concatenate([Pa, Pb, Pc], axis=1)
    stats = jnp.stack([norms, means, lin_norms, lin_coef, lin_offset], axis=1)
    return out, stats[:, None]


if __name__ == "__main__":
    # Module config (small, deterministic)
    in_channels = 4
    out_channels = (3, 4, 5)          # (Na, Nb, Nc)  -> tnk = 12
    kernel_size = 8
    B, L = 2, 64

    tnk = sum(out_channels)
    key = jax.random.PRNGKey(0)
    k_w, k_b, k_x = jax.random.split(key, 3)
    # init_type='gaussian': weight ~ randn(tnk, in_channels, kernel_size)
    weight = jax.random.normal(k_w, (tnk, in_channels, kernel_size), jnp.float32)
    # bias=(True, True, True): bias ~ randn(sum(out_channels))
    bias = jax.random.normal(k_b, (tnk,), jnp.float32).reshape(tnk, 1)
    signal = jax.random.normal(k_x, (B, in_channels, L), jnp.float32)

    out, stats = inv_conv1d_forward(signal, weight, bias, out_channels)
    out = jax.block_until_ready(out)
    stats = jax.block_until_ready(stats)

    out_ref, stats_ref = _reference_forward(signal, weight, bias, out_channels)
    np.testing.assert_allclose(np.asarray(out), np.asarray(out_ref), rtol=2e-4, atol=2e-4)
    np.testing.assert_allclose(np.asarray(stats), np.asarray(stats_ref), rtol=2e-4, atol=2e-4)

    assert out.shape == (B, tnk, L - kernel_size + 1)
    assert stats.shape == (B, 1, 5, in_channels, L - kernel_size + 1)
    print("KERNEL_OK")
</pallas_src>

<mosaic_0001>
module attributes {stable_mosaic.version = 11 : i64} {
  func.func @kernel(%arg0: i32, %arg1: i32, %arg2: memref<1x8x128xf32, #tpu.memory_space<vmem>>, %arg3: memref<1x8x128xf32, #tpu.memory_space<vmem>>, %arg4: memref<16x80xf32, #tpu.memory_space<vmem>>, %arg5: memref<16x1xf32, #tpu.memory_space<vmem>>, %arg6: memref<1x16x128xf32, #tpu.memory_space<vmem>>, %arg7: memref<1x40x128xf32, #tpu.memory_space<vmem>>) attributes {dimension_semantics = [#tpu.dimension_semantics<parallel>, #tpu.dimension_semantics<parallel>], iteration_bounds = array<i64: 2, 1>, scalar_prefetch = 0 : i64, scratch_operands = 0 : i64, tpu.core_type = #tpu.core_type<tc>, window_params = [{transform_indices = @transform_0, window_bounds = array<i64: 1, 8, 128>}, {transform_indices = @transform_1, window_bounds = array<i64: 1, 8, 128>}, {pipeline_mode = #tpu.pipeline_mode<synchronous>, transform_indices = @transform_2, window_bounds = array<i64: 16, 80>}, {pipeline_mode = #tpu.pipeline_mode<synchronous>, transform_indices = @transform_3, window_bounds = array<i64: 16, 1>}, {transform_indices = @transform_4, window_bounds = array<i64: 1, 16, 128>}, {transform_indices = @transform_5, window_bounds = array<i64: 1, 40, 128>}]} {
    %c0 = arith.constant 0 : index
    %c0_0 = arith.constant 0 : index
    %c0_1 = arith.constant 0 : index
    %0 = vector.load %arg2[%c0, %c0_0, %c0_1] : memref<1x8x128xf32, #tpu.memory_space<vmem>>, vector<1x8x128xf32>
    %1 = vector.shape_cast %0 : vector<1x8x128xf32> to vector<8x128xf32>
    %c0_2 = arith.constant 0 : index
    %c0_3 = arith.constant 0 : index
    %c0_4 = arith.constant 0 : index
    %2 = vector.load %arg3[%c0_2, %c0_3, %c0_4] : memref<1x8x128xf32, #tpu.memory_space<vmem>>, vector<1x8x128xf32>
    %3 = vector.shape_cast %2 : vector<1x8x128xf32> to vector<8x128xf32>
    %4 = tpu.concatenate %1, %3 in 1 : vector<8x128xf32>, vector<8x128xf32> -> vector<8x256xf32>
    %5 = vector.extract_strided_slice %4 {offsets = [0, 0], sizes = [8, 128], strides = [1, 1]} : vector<8x256xf32> to vector<8x128xf32>
    %6 = vector.extract_strided_slice %4 {offsets = [0, 1], sizes = [8, 128], strides = [1, 1]} : vector<8x256xf32> to vector<8x128xf32>
    %7 = vector.extract_strided_slice %4 {offsets = [0, 2], sizes = [8, 128], strides = [1, 1]} : vector<8x256xf32> to vector<8x128xf32>
    %8 = vector.extract_strided_slice %4 {offsets = [0, 3], sizes = [8, 128], strides = [1, 1]} : vector<8x256xf32> to vector<8x128xf32>
    %9 = vector.extract_strided_slice %4 {offsets = [0, 4], sizes = [8, 128], strides = [1, 1]} : vector<8x256xf32> to vector<8x128xf32>
    %10 = vector.extract_strided_slice %4 {offsets = [0, 5], sizes = [8, 128], strides = [1, 1]} : vector<8x256xf32> to vector<8x128xf32>
    %11 = vector.extract_strided_slice %4 {offsets = [0, 6], sizes = [8, 128], strides = [1, 1]} : vector<8x256xf32> to vector<8x128xf32>
    %12 = vector.extract_strided_slice %4 {offsets = [0, 7], sizes = [8, 128], strides = [1, 1]} : vector<8x256xf32> to vector<8x128xf32>
    %13 = arith.mulf %5, %5 : vector<8x128xf32>
    %cst = arith.constant 0.000000e+00 : f32
    %14 = vector.broadcast %cst : f32 to vector<8x128xf32>
    %15 = arith.addf %5, %6 : vector<8x128xf32>
    %16 = arith.mulf %6, %6 : vector<8x128xf32>
    %17 = arith.addf %13, %16 : vector<8x128xf32>
    %cst_5 = arith.constant 1.000000e+00 : f32
    %18 = vector.broadcast %cst_5 : f32 to vector<8x128xf32>
    %19 = arith.mulf %18, %6 : vector<8x128xf32>
    %20 = arith.addf %14, %19 : vector<8x128xf32>
    %21 = arith.addf %15, %7 : vector<8x128xf32>
    %22 = arith.mulf %7, %7 : vector<8x128xf32>
    %23 = arith.addf %17, %22 : vector<8x128xf32>
    %cst_6 = arith.constant 2.000000e+00 : f32
    %24 = vector.broadcast %cst_6 : f32 to vector<8x128xf32>
    %25 = arith.mulf %24, %7 : vector<8x128xf32>
    %26 = arith.addf %20, %25 : vector<8x128xf32>
    %27 = arith.addf %21, %8 : vector<8x128xf32>
    %28 = arith.mulf %8, %8 : vector<8x128xf32>
    %29 = arith.addf %23, %28 : vector<8x128xf32>
    %cst_7 = arith.constant 3.000000e+00 : f32
    %30 = vector.broadcast %cst_7 : f32 to vector<8x128xf32>
    %31 = arith.mulf %30, %8 : vector<8x128xf32>
    %32 = arith.addf %26, %31 : vector<8x128xf32>
    %33 = arith.addf %27, %9 : vector<8x128xf32>
    %34 = arith.mulf %9, %9 : vector<8x128xf32>
    %35 = arith.addf %29, %34 : vector<8x128xf32>
    %cst_8 = arith.constant 4.000000e+00 : f32
    %36 = vector.broadcast %cst_8 : f32 to vector<8x128xf32>
    %37 = arith.mulf %36, %9 : vector<8x128xf32>
    %38 = arith.addf %32, %37 : vector<8x128xf32>
    %39 = arith.addf %33, %10 : vector<8x128xf32>
    %40 = arith.mulf %10, %10 : vector<8x128xf32>
    %41 = arith.addf %35, %40 : vector<8x128xf32>
    %cst_9 = arith.constant 5.000000e+00 : f32
    %42 = vector.broadcast %cst_9 : f32 to vector<8x128xf32>
    %43 = arith.mulf %42, %10 : vector<8x128xf32>
    %44 = arith.addf %38, %43 : vector<8x128xf32>
    %45 = arith.addf %39, %11 : vector<8x128xf32>
    %46 = arith.mulf %11, %11 : vector<8x128xf32>
    %47 = arith.addf %41, %46 : vector<8x128xf32>
    %cst_10 = arith.constant 6.000000e+00 : f32
    %48 = vector.broadcast %cst_10 : f32 to vector<8x128xf32>
    %49 = arith.mulf %48, %11 : vector<8x128xf32>
    %50 = arith.addf %44, %49 : vector<8x128xf32>
    %51 = arith.addf %45, %12 : vector<8x128xf32>
    %52 = arith.mulf %12, %12 : vector<8x128xf32>
    %53 = arith.addf %47, %52 : vector<8x128xf32>
    %cst_11 = arith.constant 7.000000e+00 : f32
    %54 = vector.broadcast %cst_11 : f32 to vector<8x128xf32>
    %55 = arith.mulf %54, %12 : vector<8x128xf32>
    %56 = arith.addf %50, %55 : vector<8x128xf32>
    %cst_12 = arith.constant 1.250000e-01 : f32
    %57 = vector.broadcast %cst_12 : f32 to vector<8x128xf32>
    %58 = arith.mulf %51, %57 : vector<8x128xf32>
    %cst_13 = arith.constant 1.250000e-01 : f32
    %59 = vector.broadcast %cst_13 : f32 to vector<8x128xf32>
    %60 = arith.mulf %53, %59 : vector<8x128xf32>
    %61 = arith.mulf %58, %58 : vector<8x128xf32>
    %62 = arith.subf %60, %61 : vector<8x128xf32>
    %cst_14 = arith.constant 0.000000e+00 : f32
    %63 = vector.broadcast %cst_14 : f32 to vector<8x128xf32>
    %64 = arith.maximumf %62, %63 : vector<8x128xf32>
    %cst_15 = arith.constant 8.000000e+00 : f32
    %65 = vector.broadcast %cst_15 : f32 to vector<8x128xf32>
    %66 = arith.mulf %64, %65 : vector<8x128xf32>
    %67 = math.sqrt %66 : vector<8x128xf32>
    %cst_16 = arith.constant 0.000000e+00 : f32
    %68 = vector.broadcast %cst_16 : f32 to vector<8x128xf32>
    %69 = arith.cmpf one, %67, %68 : vector<8x128xf32>
    %cst_17 = arith.constant 0.000000e+00 : f32
    %70 = vector.broadcast %cst_17 : f32 to vector<8x128xf32>
    %71 = arith.cmpf one, %67, %70 : vector<8x128xf32>
    %cst_18 = arith.constant 1.000000e+00 : f32
    %72 = vector.broadcast %cst_18 : f32 to vector<8x128xf32>
    %73 = arith.select %71, %67, %72 : vector<8x128xi1>, vector<8x128xf32>
    %cst_19 = arith.constant 1.000000e+00 : f32
    %74 = vector.broadcast %cst_19 : f32 to vector<8x128xf32>
    %75 = arith.divf %74, %73 : vector<8x128xf32>
    %cst_20 = arith.constant 0.000000e+00 : f32
    %76 = vector.broadcast %cst_20 : f32 to vector<8x128xf32>
    %77 = arith.select %69, %75, %76 : vector<8x128xi1>, vector<8x128xf32>
    %cst_21 = arith.constant 1.250000e-01 : f32
    %78 = vector.broadcast %cst_21 : f32 to vector<8x128xf32>
    %79 = arith.mulf %56, %78 : vector<8x128xf32>
    %cst_22 = arith.constant 3.500000e+00 : f32
    %80 = vector.broadcast %cst_22 : f32 to vector<8x128xf32>
    %81 = arith.mulf %80, %58 : vector<8x128xf32>
    %82 = arith.subf %79, %81 : vector<8x128xf32>
    %cst_23 = arith.constant 0.190476194 : f32
    %83 = vector.broadcast %cst_23 : f32 to vector<8x128xf32>
    %84 = arith.mulf %82, %83 : vector<8x128xf32>
    %cst_24 = arith.constant 3.500000e+00 : f32
    %85 = vector.broadcast %cst_24 : f32 to vector<8x128xf32>
    %86 = arith.mulf %84, %85 : vector<8x128xf32>
    %87 = arith.subf %58, %86 : vector<8x128xf32>
    %88 = arith.mulf %84, %84 : vector<8x128xf32>
    %cst_25 = arith.constant 5.250000e+00 : f32
    %89 = vector.broadcast %cst_25 : f32 to vector<8x128xf32>
    %90 = arith.mulf %88, %89 : vector<8x128xf32>
    %91 = arith.subf %64, %90 : vector<8x128xf32>
    %cst_26 = arith.constant 8.000000e+00 : f32
    %92 = vector.broadcast %cst_26 : f32 to vector<8x128xf32>
    %93 = arith.mulf %92, %91 : vector<8x128xf32>
    %cst_27 = arith.constant 0.000000e+00 : f32
    %94 = vector.broadcast %cst_27 : f32 to vector<8x128xf32>
    %95 = arith.maximumf %93, %94 : vector<8x128xf32>
    %96 = math.sqrt %95 : vector<8x128xf32>
    %cst_28 = arith.constant 0.000000e+00 : f32
    %97 = vector.broadcast %cst_28 : f32 to vector<8x128xf32>
    %98 = arith.cmpf one, %96, %97 : vector<8x128xf32>
    %cst_29 = arith.constant 0.000000e+00 : f32
    %99 = vector.broadcast %cst_29 : f32 to vector<8x128xf32>
    %100 = arith.cmpf one, %96, %99 : vector<8x128xf32>
    %cst_30 = arith.constant 1.000000e+00 : f32
    %101 = vector.broadcast %cst_30 : f32 to vector<8x128xf32>
    %102 = arith.select %100, %96, %101 : vector<8x128xi1>, vector<8x128xf32>
    %cst_31 = arith.constant 1.000000e+00 : f32
    %103 = vector.broadcast %cst_31 : f32 to vector<8x128xf32>
    %104 = arith.divf %103, %102 : vector<8x128xf32>
    %cst_32 = arith.constant 0.000000e+00 : f32
    %105 = vector.broadcast %cst_32 : f32 to vector<8x128xf32>
    %106 = arith.select %98, %104, %105 : vector<8x128xi1>, vector<8x128xf32>
    %c0_33 = arith.constant 0 : index
    %c0_34 = arith.constant 0 : index
    %107 = vector.load %arg4[%c0_33, %c0_34] : memref<16x80xf32, #tpu.memory_space<vmem>>, vector<16x80xf32>
    %c0_35 = arith.constant 0 : index
    %c0_36 = arith.constant 0 : index
    %108 = vector.load %arg5[%c0_35, %c0_36] : memref<16x1xf32, #tpu.memory_space<vmem>>, vector<16x1xf32>
    %109 = tpu.concatenate %5, %6, %7, %8, %9, %10, %11, %12 in 0 : vector<8x128xf32>, vector<8x128xf32>, vector<8x128xf32>, vector<8x128xf32>, vector<8x128xf32>, vector<8x128xf32>, vector<8x128xf32>, vector<8x128xf32> -> vector<64x128xf32>
    %110 = vector.extract_strided_slice %107 {offsets = [0, 0], sizes = [3, 64], strides = [1, 1]} : vector<16x80xf32> to vector<3x64xf32>
    %cst_37 = arith.constant dense<0.000000e+00> : vector<3x128xf32>
    %111 = tpu.matmul %110, %109, %cst_37 {dimension_numbers = #tpu.dot_dimension_numbers<[1], [0], [0], [1], [0, 0, 1, 1], [], []>} : vector<3x64xf32>, vector<64x128xf32>, vector<3x128xf32> -> vector<3x128xf32>
    %112 = vector.extract_strided_slice %108 {offsets = [0, 0], sizes = [3, 1], strides = [1, 1]} : vector<16x1xf32> to vector<3x1xf32>
    %113 = vector.broadcast %112 : vector<3x1xf32> to vector<3x128xf32>
    %114 = arith.addf %111, %113 : vector<3x128xf32>
    %115 = arith.mulf %5, %77 : vector<8x128xf32>
    %116 = arith.mulf %6, %77 : vector<8x128xf32>
    %117 = arith.mulf %7, %77 : vector<8x128xf32>
    %118 = arith.mulf %8, %77 : vector<8x128xf32>
    %119 = arith.mulf %9, %77 : vector<8x128xf32>
    %120 = arith.mulf %10, %77 : vector<8x128xf32>
    %121 = arith.mulf %11, %77 : vector<8x128xf32>
    %122 = arith.mulf %12, %77 : vector<8x128xf32>
    %123 = arith.mulf %58, %77 : vector<8x128xf32>
    %cst_38 = arith.constant 0.000000e+00 : f32
    %124 = vector.broadcast %cst_38 : f32 to vector<8x128xf32>
    %125 = arith.subf %124, %123 : vector<8x128xf32>
    %126 = tpu.concatenate %115, %116, %117, %118, %119, %120, %121, %122, %125 in 0 : vector<8x128xf32>, vector<8x128xf32>, vector<8x128xf32>, vector<8x128xf32>, vector<8x128xf32>, vector<8x128xf32>, vector<8x128xf32>, vector<8x128xf32>, vector<8x128xf32> -> vector<72x128xf32>
    %127 = vector.extract_strided_slice %107 {offsets = [3, 0], sizes = [4, 72], strides = [1, 1]} : vector<16x80xf32> to vector<4x72xf32>
    %cst_39 = arith.constant dense<0.000000e+00> : vector<4x128xf32>
    %128 = tpu.matmul %127, %126, %cst_39 {dimension_numbers = #tpu.dot_dimension_numbers<[1], [0], [0], [1], [0, 0, 1, 1], [], []>} : vector<4x72xf32>, vector<72x128xf32>, vector<4x128xf32> -> vector<4x128xf32>
    %129 = vector.extract_strided_slice %108 {offsets = [3, 0], sizes = [4, 1], strides = [1, 1]} : vector<16x1xf32> to vector<4x1xf32>
    %130 = vector.broadcast %129 : vector<4x1xf32> to vector<4x128xf32>
    %131 = arith.addf %128, %130 : vector<4x128xf32>
    %132 = arith.mulf %5, %106 : vector<8x128xf32>
    %133 = arith.mulf %6, %106 : vector<8x128xf32>
    %134 = arith.mulf %7, %106 : vector<8x128xf32>
    %135 = arith.mulf %8, %106 : vector<8x128xf32>
    %136 = arith.mulf %9, %106 : vector<8x128xf32>
    %137 = arith.mulf %10, %106 : vector<8x128xf32>
    %138 = arith.mulf %11, %106 : vector<8x128xf32>
    %139 = arith.mulf %12, %106 : vector<8x128xf32>
    %140 = arith.mulf %84, %106 : vector<8x128xf32>
    %cst_40 = arith.constant 0.000000e+00 : f32
    %141 = vector.broadcast %cst_40 : f32 to vector<8x128xf32>
    %142 = arith.subf %141, %140 : vector<8x128xf32>
    %143 = arith.mulf %87, %106 : vector<8x128xf32>
    %cst_41 = arith.constant 0.000000e+00 : f32
    %144 = vector.broadcast %cst_41 : f32 to vector<8x128xf32>
    %145 = arith.subf %144, %143 : vector<8x128xf32>
    %146 = tpu.concatenate %132, %133, %134, %135, %136, %137, %138, %139, %142, %145 in 0 : vector<8x128xf32>, vector<8x128xf32>, vector<8x128xf32>, vector<8x128xf32>, vector<8x128xf32>, vector<8x128xf32>, vector<8x128xf32>, vector<8x128xf32>, vector<8x128xf32>, vector<8x128xf32> -> vector<80x128xf32>
    %147 = vector.extract_strided_slice %107 {offsets = [7, 0], sizes = [9, 80], strides = [1, 1]} : vector<16x80xf32> to vector<9x80xf32>
    %cst_42 = arith.constant dense<0.000000e+00> : vector<9x128xf32>
    %148 = tpu.matmul %147, %146, %cst_42 {dimension_numbers = #tpu.dot_dimension_numbers<[1], [0], [0], [1], [0, 0, 1, 1], [], []>} : vector<9x80xf32>, vector<80x128xf32>, vector<9x128xf32> -> vector<9x128xf32>
    %149 = vector.extract_strided_slice %108 {offsets = [7, 0], sizes = [9, 1], strides = [1, 1]} : vector<16x1xf32> to vector<9x1xf32>
    %150 = vector.broadcast %149 : vector<9x1xf32> to vector<9x128xf32>
    %151 = arith.addf %148, %150 : vector<9x128xf32>
    %152 = tpu.concatenate %114, %131, %151 in 0 : vector<3x128xf32>, vector<4x128xf32>, vector<9x128xf32> -> vector<16x128xf32>
    %c0_43 = arith.constant 0 : index
    %c0_44 = arith.constant 0 : index
    %c0_45 = arith.constant 0 : index
    %153 = vector.load %arg6[%c0_43, %c0_44, %c0_45] : memref<1x16x128xf32, #tpu.memory_space<vmem>>, vector<1x16x128xf32>
    %154 = vector.shape_cast %153 : vector<1x16x128xf32> to vector<16x128xf32>
    %155 = vector.shape_cast %152 : vector<16x128xf32> to vector<1x16x128xf32>
    tpu.vector_store %arg6[%c0_43, %c0_44, %c0_45], %155 {strides = array<i32>} : memref<1x16x128xf32, #tpu.memory_space<vmem>>, vector<1x16x128xf32>,
    %156 = tpu.concatenate %67, %58, %96, %84, %87 in 0 : vector<8x128xf32>, vector<8x128xf32>, vector<8x128xf32>, vector<8x128xf32>, vector<8x128xf32> -> vector<40x128xf32>
    %c0_46 = arith.constant 0 : index
    %c0_47 = arith.constant 0 : index
    %c0_48 = arith.constant 0 : index
    %157 = vector.load %arg7[%c0_46, %c0_47, %c0_48] : memref<1x40x128xf32, #tpu.memory_space<vmem>>, vector<1x40x128xf32>
    %158 = vector.shape_cast %157 : vector<1x40x128xf32> to vector<40x128xf32>
    %159 = vector.shape_cast %156 : vector<40x128xf32> to vector<1x40x128xf32>
    tpu.vector_store %arg7[%c0_46, %c0_47, %c0_48], %159 {strides = array<i32>} : memref<1x40x128xf32, #tpu.memory_space<vmem>>, vector<1x40x128xf32>,
    return
  }
  func.func @transform_0(%arg0: i32, %arg1: i32) -> (i32, i32, i32) {
    %c0_i32 = arith.constant 0 : i32
    %c0_i32_0 = arith.constant 0 : i32
    return %arg0, %c0_i32, %arg1 : i32, i32, i32
  }
  func.func @transform_1(%arg0: i32, %arg1: i32) -> (i32, i32, i32) {
    %c1_i32 = arith.constant 1 : i32
    %0 = arith.addi %arg1, %c1_i32 : i32
    %c1_i32_0 = arith.constant 1 : i32
    %1 = arith.muli %0, %c1_i32_0 : i32
    %c0_i32 = arith.constant 0 : i32
    %c0_i32_1 = arith.constant 0 : i32
    return %arg0, %c0_i32, %1 : i32, i32, i32
  }
  func.func @transform_2(%arg0: i32, %arg1: i32) -> (i32, i32) {
    %c0_i32 = arith.constant 0 : i32
    %c0_i32_0 = arith.constant 0 : i32
    %c0_i32_1 = arith.constant 0 : i32
    return %c0_i32, %c0_i32_0 : i32, i32
  }
  func.func @transform_3(%arg0: i32, %arg1: i32) -> (i32, i32) {
    %c0_i32 = arith.constant 0 : i32
    %c0_i32_0 = arith.constant 0 : i32
    %c0_i32_1 = arith.constant 0 : i32
    return %c0_i32, %c0_i32_0 : i32, i32
  }
  func.func @transform_4(%arg0: i32, %arg1: i32) -> (i32, i32, i32) {
    %c0_i32 = arith.constant 0 : i32
    %c0_i32_0 = arith.constant 0 : i32
    return %arg0, %c0_i32, %arg1 : i32, i32, i32
  }
  func.func @transform_5(%arg0: i32, %arg1: i32) -> (i32, i32, i32) {
    %c0_i32 = arith.constant 0 : i32
    %c0_i32_0 = arith.constant 0 : i32
    return %arg0, %c0_i32, %arg1 : i32, i32, i32
  }
}

</mosaic_0001>

<llo_original>
// kernel: tpu_custom_call.1
$region0: #{tpu_custom_call.1}
  #allocation0 [shape = 'u32[]', space=smem, size = 0x4, offset = 0x4, fixed_abs, tag = 'smem constant byte address 0x4 - core index']
  #allocation1 [shape = 'u32[144,128]{1,0:T(1,128)}', space=vmem, size = 0x12000, scoped, tag = 'internal scratch']
  %s0 = inlined_call_operand.hbm [shape: f32[2,8,256], index: 0, kind: input, shape index: {}]
  %s1 = inlined_call_operand.hbm [shape: f32[2,8,256], index: 1, kind: input, shape index: {}]
  %s2 = inlined_call_operand.vmem [shape: f32[16,80], index: 2, kind: input, shape index: {}]
  %s3 = inlined_call_operand.vmem [shape: f32[16,1], index: 3, kind: input, shape index: {}]
  %s4 = inlined_call_operand.hbm [shape: f32[2,16,128], index: 4, kind: output, shape index: {0}]
  %s5 = inlined_call_operand.hbm [shape: f32[2,40,128], index: 5, kind: output, shape index: {1}]
  %6 = xla_tuple %s4, %s5
  %s7 = sld [smem:[#allocation0]]
  $region65: #{tpu_custom_call.1} parent=0
    _
  %s9 = ssub.s32 1, %s7
  %s10 = scalar_select 0, %s9, %s7
  $region1: #{tpu_custom_call.1} parent=0
    #allocation2 [shape = 'u8[8192]{0}', space=vmem, size = 0x2000, scoped, tag = 'input window, operand 0']
    #allocation3 [shape = 's32[2]{0}', space=sflag, size = 0x8, scoped, tag = 'scoped memory for tpu_custom_call.1']
    #allocation4 [shape = 's32[2]{0}', space=sflag, size = 0x8, scoped, tag = 'scoped memory for tpu_custom_call.1']
    #allocation5 [shape = 'u8[8192]{0}', space=vmem, size = 0x2000, scoped, tag = 'input window, operand 1']
    #allocation6 [shape = 's32[2]{0}', space=sflag, size = 0x8, scoped, tag = 'scoped memory for tpu_custom_call.1']
    #allocation7 [shape = 'u8[16384]{0}', space=vmem, size = 0x4000, scoped, tag = 'output window, operand 0']
    #allocation8 [shape = 'u8[40960]{0}', space=vmem, size = 0xa000, scoped, tag = 'output window, operand 1']
    #allocation9 [shape = 's32[2]{0}', space=sflag, size = 0x8, scoped, tag = 'scoped memory for tpu_custom_call.1']
    %11 = vsyncpa [#allocation3], 0
    %s12 = scalar_lea.sflag [#allocation3], 1
    %13 = vsyncpa %s12, 0
    %14 = vsyncpa [#allocation6], 0
    %s15 = scalar_lea.sflag [#allocation6], 1
    %16 = vsyncpa %s15, 0
    %17 = vsyncpa [#allocation4], 0
    %s18 = scalar_lea.sflag [#allocation4], 1
    %19 = vsyncpa %s18, 0
    %20 = vsyncpa [#allocation9], 0
    %s21 = scalar_lea.sflag [#allocation9], 1
    %22 = vsyncpa %s21, 0
    loop: start=0, step=1, limit=4
    $region2: #{tpu_custom_call.1} parent=1 // loop_pre_header
      _
    $region3: #{tpu_custom_call.1} parent=1 // loop_header
      %s24 = sphi 0, %s28
      %p25 = scmp.ge.s32.totalorder %s24, 4
      %s31 = sphi 0, %s43
      %s32 = sphi 0, %s39
      %s33 = sphi 0, %s31
      %s34 = sphi 0, %s32
      %s35 = sphi 0, %s33
      %s36 = sphi 0, %s34
      %s48 = sphi 0, %s50
      %s51 = sphi 0, %s48
      %s52 = sphi 0, %s51
      %s68 = sphi 0, %s52
      %s78 = sphi 0, %s80
      %s81 = sphi 0, %s78
      %s82 = sphi 0, %s81
      %s98 = sphi 0, %s82
      %s102 = sphi 0, %s102
      %s104 = sphi 0, %s102
      %s105 = sphi 0, %s104
      %s119 = sphi 0, %s105
      %s123 = sphi 0, %s123
      %s125 = sphi 0, %s123
      %s126 = sphi 0, %s125
      %s140 = sphi 0, %s126
      %s148 = sphi 0, %s150
      %s151 = sphi 0, %s148
      %s152 = sphi 0, %s151
      %s168 = sphi 0, %s152
      %s176 = sphi 0, %s178
      %s179 = sphi 0, %s176
      %s180 = sphi 0, %s179
      %s196 = sphi 0, %s180
    $region4: #{tpu_custom_call.1} parent=1 // loop_header_branch
      %27 = sbr.rel (%p25) target = $region8
    $region5: #{tpu_custom_call.1} parent=1 // loop_body
      %s29 = ssub.s32 %s24, 1
      %s30 = ssub.s32 %s24, 2
      %s37 = sadd.s32 1, %s32
      %p38 = scmp.ge.s32.totalorder %s37, 1
      %s39 = scalar_select %p38, 0, %s37
      %s40 = sadd.s32 1, %s31
      %s41 = scalar_select %p38, %s40, %s31
      %p42 = scmp.ge.s32.totalorder %s41, 2
      %s43 = scalar_select %p42, 0, %s41
      %s44 = ssub.s32 %s31, %s43
      %s45 = ssub.s32 %s32, %s39
      %s46 = sor.u32 %s44, %s45
      %p47 = scmp.eq.s32.totalorder %s46, 0
      %s49 = sadd.s32 %s48, 1
      %s50 = scalar_select %p47, %s48, %s49
      %p53 = pneg %p47
      %p54 = scmp.eq.s32.totalorder %s24, 1
      %p55 = por %p53, %p54
      %p56 = scmp.ne.s32.totalorder %s48, %s51
      %p57 = scmp.eq.s32.totalorder %s24, 0
      %p58 = por %p56, %p57
      %p59 = scmp.ne.s32.totalorder %s48, %s51
      %p60 = scmp.eq.s32.totalorder %s29, 1
      %p61 = por %p59, %p60
      %p62 = scmp.ne.s32.totalorder %s51, %s52
      %p63 = scmp.eq.s32.totalorder %s29, 0
      %p64 = por %p62, %p63
      %p65 = scmp.ne.s32.totalorder %s51, %s52
      %p66 = scmp.eq.s32.totalorder %s30, 1
      %p67 = por %p65, %p66
      %p69 = scmp.ne.s32.totalorder %s52, %s68
      %p70 = scmp.eq.s32.totalorder %s30, 0
      %p71 = por %p69, %p70
      %s72 = sadd.s32 %s32, 1
      %s73 = sadd.s32 %s39, 1
      %s74 = ssub.s32 %s31, %s43
      %s75 = ssub.s32 %s72, %s73
      %s76 = sor.u32 %s74, %s75
      %p77 = scmp.eq.s32.totalorder %s76, 0
      %s79 = sadd.s32 %s78, 1
      %s80 = scalar_select %p77, %s78, %s79
      %p83 = pneg %p77
      %p84 = scmp.eq.s32.totalorder %s24, 1
      %p85 = por %p83, %p84
      %p86 = scmp.ne.s32.totalorder %s78, %s81
      %p87 = scmp.eq.s32.totalorder %s24, 0
      %p88 = por %p86, %p87
      %p89 = scmp.ne.s32.totalorder %s78, %s81
      %p90 = scmp.eq.s32.totalorder %s29, 1
      %p91 = por %p89, %p90
      %p92 = scmp.ne.s32.totalorder %s81, %s82
      %p93 = scmp.eq.s32.totalorder %s29, 0
      %p94 = por %p92, %p93
      %p95 = scmp.ne.s32.totalorder %s81, %s82
      %p96 = scmp.eq.s32.totalorder %s30, 1
      %p97 = por %p95, %p96
      %p99 = scmp.ne.s32.totalorder %s82, %s98
      %p100 = scmp.eq.s32.totalorder %s30, 0
      %p101 = por %p99, %p100
      %s103 = sadd.s32 %s102, 1
      %p106 = scmp.eq.s32.totalorder %s24, 1
      %p107 = scmp.ne.s32.totalorder %s102, %s104
      %p108 = scmp.eq.s32.totalorder %s24, 0
      %p109 = por %p107, %p108
      %p110 = scmp.ne.s32.totalorder %s102, %s104
      %p111 = scmp.eq.s32.totalorder %s29, 1
      %p112 = por %p110, %p111
      %p113 = scmp.ne.s32.totalorder %s104, %s105
      %p114 = scmp.eq.s32.totalorder %s29, 0
      %p115 = por %p113, %p114
      %p116 = scmp.ne.s32.totalorder %s104, %s105
      %p117 = scmp.eq.s32.totalorder %s30, 1
      %p118 = por %p116, %p117
      %p120 = scmp.ne.s32.totalorder %s105, %s119
      %p121 = scmp.eq.s32.totalorder %s30, 0
      %p122 = por %p120, %p121
      %s124 = sadd.s32 %s123, 1
      %p127 = scmp.eq.s32.totalorder %s24, 1
      %p128 = scmp.ne.s32.totalorder %s123, %s125
      %p129 = scmp.eq.s32.totalorder %s24, 0
      %p130 = por %p128, %p129
      %p131 = scmp.ne.s32.totalorder %s123, %s125
      %p132 = scmp.eq.s32.totalorder %s29, 1
      %p133 = por %p131, %p132
      %p134 = scmp.ne.s32.totalorder %s125, %s126
      %p135 = scmp.eq.s32.totalorder %s29, 0
      %p136 = por %p134, %p135
      %p137 = scmp.ne.s32.totalorder %s125, %s126
      %p138 = scmp.eq.s32.totalorder %s30, 1
      %p139 = por %p137, %p138
      %p141 = scmp.ne.s32.totalorder %s126, %s140
      %p142 = scmp.eq.s32.totalorder %s30, 0
      %p143 = por %p141, %p142
      %s144 = ssub.s32 %s31, %s43
      %s145 = ssub.s32 %s32, %s39
      %s146 = sor.u32 %s144, %s145
      %p147 = scmp.eq.s32.totalorder %s146, 0
      %s149 = sadd.s32 %s148, 1
      %s150 = scalar_select %p147, %s148, %s149
      %p153 = pneg %p147
      %p154 = scmp.eq.s32.totalorder %s24, 1
      %p155 = por %p153, %p154
      %p156 = scmp.ne.s32.totalorder %s148, %s151
      %p157 = scmp.eq.s32.totalorder %s24, 0
      %p158 = por %p156, %p157
      %p159 = scmp.ne.s32.totalorder %s148, %s151
      %p160 = scmp.eq.s32.totalorder %s29, 1
      %p161 = por %p159, %p160
      %p162 = scmp.ne.s32.totalorder %s151, %s152
      %p163 = scmp.eq.s32.totalorder %s29, 0
      %p164 = por %p162, %p163
      %p165 = scmp.ne.s32.totalorder %s151, %s152
      %p166 = scmp.eq.s32.totalorder %s30, 1
      %p167 = por %p165, %p166
      %p169 = scmp.ne.s32.totalorder %s152, %s168
      %p170 = scmp.eq.s32.totalorder %s30, 0
      %p171 = por %p169, %p170
      %s172 = ssub.s32 %s31, %s43
      %s173 = ssub.s32 %s32, %s39
      %s174 = sor.u32 %s172, %s173
      %p175 = scmp.eq.s32.totalorder %s174, 0
      %s177 = sadd.s32 %s176, 1
      %s178 = scalar_select %p175, %s176, %s177
      %p181 = pneg %p175
      %p182 = scmp.eq.s32.totalorder %s24, 1
      %p183 = por %p181, %p182
      %p184 = scmp.ne.s32.totalorder %s176, %s179
      %p185 = scmp.eq.s32.totalorder %s24, 0
      %p186 = por %p184, %p185
      %p187 = scmp.ne.s32.totalorder %s176, %s179
      %p188 = scmp.eq.s32.totalorder %s29, 1
      %p189 = por %p187, %p188
      %p190 = scmp.ne.s32.totalorder %s179, %s180
      %p191 = scmp.eq.s32.totalorder %s29, 0
      %p192 = por %p190, %p191
      %p193 = scmp.ne.s32.totalorder %s179, %s180
      %p194 = scmp.eq.s32.totalorder %s30, 1
      %p195 = por %p193, %p194
      %p197 = scmp.ne.s32.totalorder %s180, %s196
      %p198 = scmp.eq.s32.totalorder %s30, 0
      %p199 = por %p197, %p198
      %p200 = scmp.le.s32.totalorder 1, %s24
      %p201 = scmp.lt.s32.totalorder %s24, 3
      %p202 = pnand %p200, %p201
      %p203 = pneg %p202
      // Predicated region
      $region9: #{tpu_custom_call.1} parent=5 // pred_check
        _
      $region10: #{tpu_custom_call.1} parent=5 // pred_check_branch
        %205 = sbr.rel (%p202) target = $region12
      $region11: #{tpu_custom_call.1} parent=5 // pred_region
        %s206 = ssub.s32 %s24, 1
        // Predicated region
        $region13: #{tpu_custom_call.1} parent=11 // pred_check
          %p207 = pneg %p115
        $region14: #{tpu_custom_call.1} parent=11 // pred_check_branch
          %209 = sbr.rel (%p207) target = $region16
        $region15: #{tpu_custom_call.1} parent=11 // pred_region
          _
        $region16: #{tpu_custom_call.1} parent=11 // pred_fallthru
          _
        // Predicated region
        $region17: #{tpu_custom_call.1} parent=11 // pred_check
          %p210 = pneg %p136
        $region18: #{tpu_custom_call.1} parent=11 // pred_check_branch
          %212 = sbr.rel (%p210) target = $region20
        $region19: #{tpu_custom_call.1} parent=11 // pred_region
          _
        $region20: #{tpu_custom_call.1} parent=11 // pred_fallthru
          _
      $region12: #{tpu_custom_call.1} parent=5 // pred_fallthru
        _
      %p213 = scmp.lt.s32.totalorder %s24, 2
      // Predicated region
      $region21: #{tpu_custom_call.1} parent=5 // pred_check
        %p214 = pneg %p213
      $region22: #{tpu_custom_call.1} parent=5 // pred_check_branch
        %216 = sbr.rel (%p214) target = $region24
      $region23: #{tpu_custom_call.1} parent=5 // pred_region
        // Predicated region
        $region25: #{tpu_custom_call.1} parent=23 // pred_check
          %p217 = pneg %p58
        $region26: #{tpu_custom_call.1} parent=23 // pred_check_branch
          %219 = sbr.rel (%p217) target = $region28
        $region27: #{tpu_custom_call.1} parent=23 // pred_region
          %s220 = sand.u32 %s48, 1
          %s221 = scalar_lea.sflag [#allocation3], %s220
          %s222 = sand.u32 %s48, 1
          %s223 = smul.addr %s222, 8
          %s224 = scalar_lea.vmem [#allocation2], %s223
          %s226 = ssub.s32 128, 128
          %227 = vsyncadd %s221, %s226
          %s228 = smul.addr %s31, 2
          %s229 = sadd.s32 %s32, %s228
          %s230 = smul.addr %s229, 128
          %s231 = scalar_lea.hbm %s0, %s230
          %s233 = sshll.u32 %s224, 4
          %s234 = int_to_ptr.vmem [resolvable:$true] %s233
          %236 = dma.hbm_to_vmem [thread:$0]  %s231, 128, %s234, %s221
        $region28: #{tpu_custom_call.1} parent=23 // pred_fallthru
          _
        // Predicated region
        $region29: #{tpu_custom_call.1} parent=23 // pred_check
          %p237 = pneg %p88
        $region30: #{tpu_custom_call.1} parent=23 // pred_check_branch
          %239 = sbr.rel (%p237) target = $region32
        $region31: #{tpu_custom_call.1} parent=23 // pred_region
          %s240 = sand.u32 %s78, 1
          %s241 = scalar_lea.sflag [#allocation6], %s240
          %s242 = sand.u32 %s78, 1
          %s243 = smul.addr %s242, 8
          %s244 = scalar_lea.vmem [#allocation5], %s243
          %s245 = sadd.s32 %s32, 1
          %s247 = ssub.s32 128, 128
          %248 = vsyncadd %s241, %s247
          %s249 = smul.addr %s31, 2
          %s250 = sadd.s32 %s245, %s249
          %s251 = smul.addr %s250, 128
          %s252 = scalar_lea.hbm %s1, %s251
          %s254 = sshll.u32 %s244, 4
          %s255 = int_to_ptr.vmem [resolvable:$true] %s254
          %257 = dma.hbm_to_vmem [thread:$0]  %s252, 128, %s255, %s241
        $region32: #{tpu_custom_call.1} parent=23 // pred_fallthru
          _
      $region24: #{tpu_custom_call.1} parent=5 // pred_fallthru
        _
      %p258 = scmp.le.s32.totalorder 1, %s24
      %p259 = scmp.lt.s32.totalorder %s24, 3
      %p260 = pnand %p258, %p259
      %p261 = pneg %p260
      // Predicated region
      $region33: #{tpu_custom_call.1} parent=5 // pred_check
        _
      $region34: #{tpu_custom_call.1} parent=5 // pred_check_branch
        %263 = sbr.rel (%p260) target = $region36
      $region35: #{tpu_custom_call.1} parent=5 // pred_region
        %s264 = ssub.s32 %s24, 1
        %s265 = sand.u32 %s51, 1
        %s266 = scalar_lea.sflag [#allocation3], %s265
        %s267 = sand.u32 %s51, 1
        %s268 = smul.addr %s267, 8
        %s269 = scalar_lea.vmem [#allocation2], %s268
        // Predicated region
        $region37: #{tpu_custom_call.1} parent=35 // pred_check
          %p270 = pneg %p64
        $region38: #{tpu_custom_call.1} parent=35 // pred_check_branch
          %272 = sbr.rel (%p270) target = $region40
        $region39: #{tpu_custom_call.1} parent=35 // pred_region
          %273 = dma.done %s266, 128
        $region40: #{tpu_custom_call.1} parent=35 // pred_fallthru
          _
        %s274 = sand.u32 %s81, 1
        %s275 = scalar_lea.sflag [#allocation6], %s274
        %s276 = sand.u32 %s81, 1
        %s277 = smul.addr %s276, 8
        %s278 = scalar_lea.vmem [#allocation5], %s277
        // Predicated region
        $region41: #{tpu_custom_call.1} parent=35 // pred_check
          %p279 = pneg %p94
        $region42: #{tpu_custom_call.1} parent=35 // pred_check_branch
          %281 = sbr.rel (%p279) target = $region44
        $region43: #{tpu_custom_call.1} parent=35 // pred_region
          %282 = dma.done %s275, 128
        $region44: #{tpu_custom_call.1} parent=35 // pred_fallthru
          _
        %s283 = sand.u32 %s51, 1
        %s284 = scalar_lea.sflag [#allocation3], %s283
        %s285 = sand.u32 %s51, 1
        %s286 = smul.addr %s285, 8
        %s287 = scalar_lea.vmem [#allocation2], %s286
        %p288 = pneg %p64
        %p289 = pneg %p61
        %s290 = sand.u32 %s81, 1
        %s291 = scalar_lea.sflag [#allocation6], %s290
        %s292 = sand.u32 %s81, 1
        %s293 = smul.addr %s292, 8
        %s294 = scalar_lea.vmem [#allocation5], %s293
        %p295 = pneg %p94
        %p296 = pneg %p91
        %p297 = pneg %p115
        %p298 = pneg %p112
        %p299 = pneg %p136
        %p300 = pneg %p133
        %p301 = pneg %p164
        %p302 = pneg %p161
        %s303 = sand.u32 %s151, 1
        %s304 = scalar_lea.sflag [#allocation4], %s303
        %s305 = sand.u32 %s151, 1
        %s306 = smul.addr %s305, 16
        %s307 = scalar_lea.vmem [#allocation7], %s306
        %p308 = pneg %p192
        %p309 = pneg %p189
        %s310 = sand.u32 %s179, 1
        %s311 = scalar_lea.sflag [#allocation9], %s310
        %s312 = sand.u32 %s179, 1
        %s313 = smul.addr %s312, 40
        %s314 = scalar_lea.vmem [#allocation8], %s313
        %s315 = sadd.s32 %s34, 1
        %v316 = vld [vmem:[%s269] sm:$0xff]
        %v317 = vld [vmem:[%s278] sm:$0xff]
        %v318 = vmul.f32 %v316, %v316
        %321 = vrot.lane.b32.xlu0 %v316, 127
        %v322 = vpop.permute.xlu0 %321
        %323 = vrot.lane.b32.xlu0 %v317, 127
        %v324 = vpop.permute.xlu0 %323
        %vm325 = vcmask 1039360
        %v326 = vsel %vm325, %v322, %v324
        %v328 = vadd.f32 %v316, %v326
        %v329 = vmul.f32 %v317, %v317
        %332 = vrot.lane.b32.xlu0 %v318, 127
        %v333 = vpop.permute.xlu0 %332
        %334 = vrot.lane.b32.xlu0 %v329, 127
        %v335 = vpop.permute.xlu0 %334
        %v336 = vsel %vm325, %v333, %v335
        %v338 = vadd.f32 %v318, %v336
        %v339 = vadd.f32 %v316, 0.0
        %v340 = vadd.f32 %v317, 0.0
        %341 = vrot.lane.b32.xlu0 %v316, 126
        %v342 = vpop.permute.xlu0 %341
        %343 = vrot.lane.b32.xlu0 %v317, 126
        %v344 = vpop.permute.xlu0 %343
        %vm345 = vcmask 1031168
        %v346 = vsel %vm345, %v342, %v344
        %v348 = vadd.f32 %v328, %v346
        %349 = vrot.lane.b32.xlu0 %v318, 126
        %v350 = vpop.permute.xlu0 %349
        %351 = vrot.lane.b32.xlu0 %v329, 126
        %v352 = vpop.permute.xlu0 %351
        %v353 = vsel %vm345, %v350, %v352
        %v355 = vadd.f32 %v338, %v353
        %v356 = vmul.f32 %v316, 2.0
        %v357 = vmul.f32 %v317, 2.0
        %360 = vrot.lane.b32.xlu0 %v356, 127
        %v361 = vpop.permute.xlu0 %360
        %362 = vrot.lane.b32.xlu0 %v357, 127
        %v363 = vpop.permute.xlu0 %362
        %v364 = vsel %vm325, %v361, %v363
        %v367 = vadd.f32 %v339, %v364
        %v368 = vadd.f32 %v340, %v363
        %369 = vrot.lane.b32.xlu0 %v316, 125
        %v370 = vpop.permute.xlu0 %369
        %371 = vrot.lane.b32.xlu0 %v317, 125
        %v372 = vpop.permute.xlu0 %371
        %vm373 = vcmask 1022976
        %v374 = vsel %vm373, %v370, %v372
        %v376 = vadd.f32 %v348, %v374
        %377 = vrot.lane.b32.xlu0 %v318, 125
        %v378 = vpop.permute.xlu0 %377
        %379 = vrot.lane.b32.xlu0 %v329, 125
        %v380 = vpop.permute.xlu0 %379
        %v381 = vsel %vm373, %v378, %v380
        %v383 = vadd.f32 %v355, %v381
        %v384 = vmul.f32 %v316, 3.0
        %v385 = vmul.f32 %v317, 3.0
        %388 = vrot.lane.b32.xlu0 %v384, 126
        %v389 = vpop.permute.xlu0 %388
        %390 = vrot.lane.b32.xlu0 %v385, 126
        %v391 = vpop.permute.xlu0 %390
        %v392 = vsel %vm345, %v389, %v391
        %v395 = vadd.f32 %v367, %v392
        %v396 = vadd.f32 %v368, %v391
        %397 = vrot.lane.b32.xlu0 %v316, 124
        %v398 = vpop.permute.xlu0 %397
        %399 = vrot.lane.b32.xlu0 %v317, 124
        %v400 = vpop.permute.xlu0 %399
        %vm401 = vcmask 1014784
        %v402 = vsel %vm401, %v398, %v400
        %v404 = vadd.f32 %v376, %v402
        %405 = vrot.lane.b32.xlu0 %v318, 124
        %v406 = vpop.permute.xlu0 %405
        %407 = vrot.lane.b32.xlu0 %v329, 124
        %v408 = vpop.permute.xlu0 %407
        %v409 = vsel %vm401, %v406, %v408
        %v411 = vadd.f32 %v383, %v409
        %v412 = vmul.f32 %v316, 4.0
        %v413 = vmul.f32 %v317, 4.0
        %416 = vrot.lane.b32.xlu0 %v412, 125
        %v417 = vpop.permute.xlu0 %416
        %418 = vrot.lane.b32.xlu0 %v413, 125
        %v419 = vpop.permute.xlu0 %418
        %v420 = vsel %vm373, %v417, %v419
        %v423 = vadd.f32 %v395, %v420
        %v424 = vadd.f32 %v396, %v419
        %425 = vrot.lane.b32.xlu0 %v316, 123
        %v426 = vpop.permute.xlu0 %425
        %427 = vrot.lane.b32.xlu0 %v317, 123
        %v428 = vpop.permute.xlu0 %427
        %vm429 = vcmask 1006592
        %v430 = vsel %vm429, %v426, %v428
        %v432 = vadd.f32 %v404, %v430
        %433 = vrot.lane.b32.xlu0 %v318, 123
        %v434 = vpop.permute.xlu0 %433
        %435 = vrot.lane.b32.xlu0 %v329, 123
        %v436 = vpop.permute.xlu0 %435
        %v437 = vsel %vm429, %v434, %v436
        %v439 = vadd.f32 %v411, %v437
        %v440 = vmul.f32 %v316, 5.0
        %v441 = vmul.f32 %v317, 5.0
        %444 = vrot.lane.b32.xlu0 %v440, 124
        %v445 = vpop.permute.xlu0 %444
        %446 = vrot.lane.b32.xlu0 %v441, 124
        %v447 = vpop.permute.xlu0 %446
        %v448 = vsel %vm401, %v445, %v447
        %v451 = vadd.f32 %v423, %v448
        %v452 = vadd.f32 %v424, %v447
        %453 = vrot.lane.b32.xlu0 %v316, 122
        %v454 = vpop.permute.xlu0 %453
        %455 = vrot.lane.b32.xlu0 %v317, 122
        %v456 = vpop.permute.xlu0 %455
        %vm457 = vcmask 998400
        %v458 = vsel %vm457, %v454, %v456
        %v460 = vadd.f32 %v432, %v458
        %461 = vrot.lane.b32.xlu0 %v318, 122
        %v462 = vpop.permute.xlu0 %461
        %463 = vrot.lane.b32.xlu0 %v329, 122
        %v464 = vpop.permute.xlu0 %463
        %v465 = vsel %vm457, %v462, %v464
        %v467 = vadd.f32 %v439, %v465
        %v468 = vmul.f32 %v316, 6.0
        %v469 = vmul.f32 %v317, 6.0
        %472 = vrot.lane.b32.xlu0 %v468, 123
        %v473 = vpop.permute.xlu0 %472
        %474 = vrot.lane.b32.xlu0 %v469, 123
        %v475 = vpop.permute.xlu0 %474
        %v476 = vsel %vm429, %v473, %v475
        %v479 = vadd.f32 %v451, %v476
        %v480 = vadd.f32 %v452, %v475
        %481 = vrot.lane.b32.xlu0 %v316, 121
        %v482 = vpop.permute.xlu0 %481
        %483 = vrot.lane.b32.xlu0 %v317, 121
        %v484 = vpop.permute.xlu0 %483
        %vm485 = vcmask 990208
        %v486 = vsel %vm485, %v482, %v484
        %v488 = vadd.f32 %v460, %v486
        %489 = vrot.lane.b32.xlu0 %v318, 121
        %v490 = vpop.permute.xlu0 %489
        %491 = vrot.lane.b32.xlu0 %v329, 121
        %v492 = vpop.permute.xlu0 %491
        %v493 = vsel %vm485, %v490, %v492
        %v495 = vadd.f32 %v467, %v493
        %v496 = vmul.f32 %v316, 7.0
        %v497 = vmul.f32 %v317, 7.0
        %500 = vrot.lane.b32.xlu0 %v496, 122
        %v501 = vpop.permute.xlu0 %500
        %502 = vrot.lane.b32.xlu0 %v497, 122
        %v503 = vpop.permute.xlu0 %502
        %v504 = vsel %vm457, %v501, %v503
        %v507 = vadd.f32 %v479, %v504
        %v508 = vadd.f32 %v480, %v503
        %v509 = vmul.f32 %v488, 0.125
        %v510 = vmul.f32 %v495, 0.125
        %v511 = vmul.f32 %v509, %v509
        %v512 = vsub.f32 %v510, %v511
        %v513 = vmax.f32 %v512, 0.0
        %v514 = vmul.f32 %v513, 8.0
        %v515 = vrsqrt.pop %v514
        %v516 = vmul.f32 %v514, %v515
        %vm517 = vcmp.eq.f32.partialorder %v514, inf
        %v518 = vsel %vm517, %v514, %v516
        %vm519 = vcmp.eq.f32.partialorder %v514, 0.0
        %v520 = vand.u32 %v514, 2147483648
        %v521 = vsel %vm519, %v520, %v518
        %vm522 = vcmp.ne.f32.partialorder %v521, 0.0
        %v523 = vsel %vm522, %v521, 1.0
        %v524 = vrcp.pop %v523
        %v525 = vmul.f32 1.0, %v524
        %v526 = vsel %vm522, %v525, 0.0
        %v527 = vmul.f32 %v507, 0.125
        %v528 = vmul.f32 %v508, 0.125
        %v529 = vmul.f32 %v509, 3.5
        %531 = vrot.lane.b32.xlu0 %v529, 1
        %v532 = vpop.permute.xlu0 %531
        %v534 = vsub.f32 %v527, %v532
        %v535 = vsub.f32 %v528, %v532
        %v536 = vmul.f32 %v534, 0.1904762
        %v537 = vmul.f32 %v535, 0.1904762
        %v538 = vmul.f32 %v536, 3.5
        %v539 = vmul.f32 %v537, 3.5
        %542 = vrot.lane.b32.xlu0 %v538, 127
        %v543 = vpop.permute.xlu0 %542
        %544 = vrot.lane.b32.xlu0 %v539, 127
        %v545 = vpop.permute.xlu0 %544
        %v546 = vsel %vm325, %v543, %v545
        %v548 = vsub.f32 %v509, %v546
        %v549 = vmul.f32 %v536, %v536
        %v550 = vmul.f32 %v537, %v537
        %v551 = vmul.f32 %v549, 5.25
        %v552 = vmul.f32 %v550, 5.25
        %555 = vrot.lane.b32.xlu0 %v551, 127
        %v556 = vpop.permute.xlu0 %555
        %557 = vrot.lane.b32.xlu0 %v552, 127
        %v558 = vpop.permute.xlu0 %557
        %v559 = vsel %vm325, %v556, %v558
        %v561 = vsub.f32 %v513, %v559
        %v562 = vmul.f32 %v561, 8.0
        %v563 = vmax.f32 %v562, 0.0
        %v564 = vrsqrt.pop %v563
        %v565 = vmul.f32 %v563, %v564
        %vm566 = vcmp.eq.f32.partialorder %v563, inf
        %v567 = vsel %vm566, %v563, %v565
        %vm568 = vcmp.eq.f32.partialorder %v563, 0.0
        %v569 = vand.u32 %v563, 2147483648
        %v570 = vsel %vm568, %v569, %v567
        %vm571 = vcmp.ne.f32.partialorder %v570, 0.0
        %v572 = vsel %vm571, %v570, 1.0
        %v573 = vrcp.pop %v572
        %v574 = vmul.f32 1.0, %v573
        %v575 = vsel %vm571, %v574, 0.0
        %v576 = vld [vmem:[%s2] sm:$0xff]
        %v577 = vld [vmem:[%s2 + $0x8] sm:$0xff]
        %v578 = vld [vmem:[%s3] sm:$0xff]
        %v579 = vld [vmem:[%s3 + $0x8] sm:$0xff]
        %581 = vset.pattern.permute.xlu0 0
        %582 = vperm.xlu0 %581, %v578
        %v583 = vpop.permute.xlu0 %582
        %vm585 = vcmask 523264
        %v587 = vsel %vm585, %v576, 0
        %589 = vmatprep.subr.mxu0 0.0
        %590 = vmatpush1.msra.mxu0 %v316
        %591 = vmatprep.subr.mxu0 0.0
        %592 = vmatpush1.msra.mxu0 %v326
        %593 = vmatprep.subr.mxu0 0.0
        %594 = vmatpush1.msra.mxu0 %v346
        %595 = vmatprep.subr.mxu0 0.0
        %596 = vmatpush1.msra.mxu0 %v374
        %597 = vmatprep.subr.mxu0 0.0
        %598 = vmatpush1.msra.mxu0 %v402
        %599 = vmatprep.subr.mxu0 0.0
        %600 = vmatpush1.msra.mxu0 %v430
        %601 = vmatprep.subr.mxu0 0.0
        %602 = vmatpush1.msra.mxu0 %v458
        %603 = vmatprep.subr.mxu0 0.0
        %604 = vmatpush1.msra.mxu0 %v486
        %605 = vmatprep.subr.mxu0 0.0
        %606 = vmatpush1.msra.mxu0 0.0
        %607 = vmatprep.subr.mxu0 0.0
        %608 = vmatpush1.msra.mxu0 0.0
        %609 = vmatprep.subr.mxu0 0.0
        %610 = vmatpush1.msra.mxu0 0.0
        %611 = vmatprep.subr.mxu0 0.0
        %612 = vmatpush1.msra.mxu0 0.0
        %613 = vmatprep.subr.mxu0 0.0
        %614 = vmatpush1.msra.mxu0 0.0
        %615 = vmatprep.subr.mxu0 0.0
        %616 = vmatpush1.msra.mxu0 0.0
        %617 = vmatprep.subr.mxu0 0.0
        %618 = vmatpush1.msra.mxu0 0.0
        %619 = vmatprep.subr.mxu0 0.0
        %620 = vmatpush1.msra.mxu0 0.0
        %621 = vmatprep.subr.mxu0 0.0
        %622 = vmatpush1.msra.mxu0 0.0
        %623 = vmatprep.subr.mxu0 0.0
        %624 = vmatpush1.msra.mxu0 0.0
        %625 = vmatprep.subr.mxu0 0.0
        %626 = vmatpush1.msra.mxu0 0.0
        %627 = vmatprep.subr.mxu0 0.0
        %628 = vmatpush1.msra.mxu0 0.0
        %629 = vmatprep.subr.mxu0 0.0
        %630 = vmatpush1.msra.mxu0 0.0
        %631 = vmatprep.subr.mxu0 0.0
        %632 = vmatpush1.msra.mxu0 0.0
        %633 = vmatprep.subr.mxu0 0.0
        %634 = vmatpush1.msra.mxu0 0.0
        %635 = vmatprep.subr.mxu0 0.0
        %636 = vmatpush1.msra.mxu0 0.0
        %637 = vmatprep.subr.mxu0 0.0
        %638 = vmatpush1.msra.mxu0 0.0
        %639 = vmatprep.subr.mxu0 0.0
        %640 = vmatpush1.msra.mxu0 0.0
        %641 = vmatprep.subr.mxu0 0.0
        %642 = vmatpush1.msra.mxu0 0.0
        %643 = vmatprep.subr.mxu0 0.0
        %644 = vmatpush1.msra.mxu0 0.0
        %645 = vmatprep.subr.mxu0 0.0
        %646 = vmatpush1.msra.mxu0 0.0
        %647 = vmatprep.subr.mxu0 0.0
        %648 = vmatpush1.msra.mxu0 0.0
        %649 = vmatprep.subr.mxu0 0.0
        %650 = vmatpush1.msra.mxu0 0.0
        %651 = vmatprep.subr.mxu0 0.0
        %652 = vmatpush1.msra.mxu0 0.0
        %653 = vmatprep.mubr.f32.mxu0 0.0
        %654 = vmatmul.mubr.f32.gmra.mrb[0].mxu0 %v587
        %v655 = vpop.f32.mrb[0].mxu0
        %v656 = vadd.f32 %v583, %v655
        %v657 = vpop.f32.mrb[0].mxu0
        %658 = vdwg.mxu0
        %v659 = vmul.f32 %v316, %v526
        %661 = vrot.lane.b32.xlu0 %v526, 1
        %v662 = vpop.permute.xlu0 %661
        %v664 = vmul.f32 %v316, %v662
        %v665 = vmul.f32 %v317, %v662
        %666 = vrot.lane.b32.xlu0 %v526, 2
        %v667 = vpop.permute.xlu0 %666
        %v669 = vmul.f32 %v316, %v667
        %v670 = vmul.f32 %v317, %v667
        %671 = vrot.lane.b32.xlu0 %v526, 3
        %v672 = vpop.permute.xlu0 %671
        %v674 = vmul.f32 %v316, %v672
        %v675 = vmul.f32 %v317, %v672
        %676 = vrot.lane.b32.xlu0 %v526, 4
        %v677 = vpop.permute.xlu0 %676
        %v679 = vmul.f32 %v316, %v677
        %v680 = vmul.f32 %v317, %v677
        %681 = vrot.lane.b32.xlu0 %v526, 5
        %v682 = vpop.permute.xlu0 %681
        %v684 = vmul.f32 %v316, %v682
        %v685 = vmul.f32 %v317, %v682
        %686 = vrot.lane.b32.xlu0 %v526, 6
        %v687 = vpop.permute.xlu0 %686
        %v689 = vmul.f32 %v316, %v687
        %v690 = vmul.f32 %v317, %v687
        %691 = vrot.lane.b32.xlu0 %v526, 7
        %v692 = vpop.permute.xlu0 %691
        %v694 = vmul.f32 %v316, %v692
        %v695 = vmul.f32 %v317, %v692
        %v696 = vmul.f32 %v509, %v526
        %v697 = vsub.f32 0.0, %v696
        %700 = vrot.lane.b32.xlu0 %v664, 127
        %v701 = vpop.permute.xlu0 %700
        %702 = vrot.lane.b32.xlu0 %v665, 127
        %v703 = vpop.permute.xlu0 %702
        %v704 = vsel %vm325, %v701, %v703
        %708 = vrot.lane.b32.xlu0 %v669, 126
        %v709 = vpop.permute.xlu0 %708
        %710 = vrot.lane.b32.xlu0 %v670, 126
        %v711 = vpop.permute.xlu0 %710
        %v712 = vsel %vm345, %v709, %v711
        %716 = vrot.lane.b32.xlu0 %v674, 125
        %v717 = vpop.permute.xlu0 %716
        %718 = vrot.lane.b32.xlu0 %v675, 125
        %v719 = vpop.permute.xlu0 %718
        %v720 = vsel %vm373, %v717, %v719
        %724 = vrot.lane.b32.xlu0 %v679, 124
        %v725 = vpop.permute.xlu0 %724
        %726 = vrot.lane.b32.xlu0 %v680, 124
        %v727 = vpop.permute.xlu0 %726
        %v728 = vsel %vm401, %v725, %v727
        %732 = vrot.lane.b32.xlu0 %v684, 123
        %v733 = vpop.permute.xlu0 %732
        %734 = vrot.lane.b32.xlu0 %v685, 123
        %v735 = vpop.permute.xlu0 %734
        %v736 = vsel %vm429, %v733, %v735
        %740 = vrot.lane.b32.xlu0 %v689, 122
        %v741 = vpop.permute.xlu0 %740
        %742 = vrot.lane.b32.xlu0 %v690, 122
        %v743 = vpop.permute.xlu0 %742
        %v744 = vsel %vm457, %v741, %v743
        %748 = vrot.lane.b32.xlu0 %v694, 121
        %v749 = vpop.permute.xlu0 %748
        %750 = vrot.lane.b32.xlu0 %v695, 121
        %v751 = vpop.permute.xlu0 %750
        %v752 = vsel %vm485, %v749, %v751
        %v754 = vrot.slane %v576, 3
        %v755 = vrot.slane %v583, 3
        %vm757 = vcmask 588800
        %v758 = vsel %vm757, %v754, 0
        %760 = vmatprep.subr.mxu0 0.0
        %761 = vmatpush1.msra.mxu0 %v659
        %762 = vmatprep.subr.mxu0 0.0
        %763 = vmatpush1.msra.mxu0 %v704
        %764 = vmatprep.subr.mxu0 0.0
        %765 = vmatpush1.msra.mxu0 %v712
        %766 = vmatprep.subr.mxu0 0.0
        %767 = vmatpush1.msra.mxu0 %v720
        %768 = vmatprep.subr.mxu0 0.0
        %769 = vmatpush1.msra.mxu0 %v728
        %770 = vmatprep.subr.mxu0 0.0
        %771 = vmatpush1.msra.mxu0 %v736
        %772 = vmatprep.subr.mxu0 0.0
        %773 = vmatpush1.msra.mxu0 %v744
        %774 = vmatprep.subr.mxu0 0.0
        %775 = vmatpush1.msra.mxu0 %v752
        %776 = vmatprep.subr.mxu0 0.0
        %777 = vmatpush1.msra.mxu0 %v697
        %778 = vmatprep.subr.mxu0 0.0
        %779 = vmatpush1.msra.mxu0 0.0
        %780 = vmatprep.subr.mxu0 0.0
        %781 = vmatpush1.msra.mxu0 0.0
        %782 = vmatprep.subr.mxu0 0.0
        %783 = vmatpush1.msra.mxu0 0.0
        %784 = vmatprep.subr.mxu0 0.0
        %785 = vmatpush1.msra.mxu0 0.0
        %786 = vmatprep.subr.mxu0 0.0
        %787 = vmatpush1.msra.mxu0 0.0
        %788 = vmatprep.subr.mxu0 0.0
        %789 = vmatpush1.msra.mxu0 0.0
        %790 = vmatprep.subr.mxu0 0.0
        %791 = vmatpush1.msra.mxu0 0.0
        %792 = vmatprep.subr.mxu0 0.0
        %793 = vmatpush1.msra.mxu0 0.0
        %794 = vmatprep.subr.mxu0 0.0
        %795 = vmatpush1.msra.mxu0 0.0
        %796 = vmatprep.subr.mxu0 0.0
        %797 = vmatpush1.msra.mxu0 0.0
        %798 = vmatprep.subr.mxu0 0.0
        %799 = vmatpush1.msra.mxu0 0.0
        %800 = vmatprep.subr.mxu0 0.0
        %801 = vmatpush1.msra.mxu0 0.0
        %802 = vmatprep.subr.mxu0 0.0
        %803 = vmatpush1.msra.mxu0 0.0
        %804 = vmatprep.subr.mxu0 0.0
        %805 = vmatpush1.msra.mxu0 0.0
        %806 = vmatprep.subr.mxu0 0.0
        %807 = vmatpush1.msra.mxu0 0.0
        %808 = vmatprep.subr.mxu0 0.0
        %809 = vmatpush1.msra.mxu0 0.0
        %810 = vmatprep.subr.mxu0 0.0
        %811 = vmatpush1.msra.mxu0 0.0
        %812 = vmatprep.subr.mxu0 0.0
        %813 = vmatpush1.msra.mxu0 0.0
        %814 = vmatprep.subr.mxu0 0.0
        %815 = vmatpush1.msra.mxu0 0.0
        %816 = vmatprep.subr.mxu0 0.0
        %817 = vmatpush1.msra.mxu0 0.0
        %818 = vmatprep.subr.mxu0 0.0
        %819 = vmatpush1.msra.mxu0 0.0
        %820 = vmatprep.subr.mxu0 0.0
        %821 = vmatpush1.msra.mxu0 0.0
        %822 = vmatprep.subr.mxu0 0.0
        %823 = vmatpush1.msra.mxu0 0.0
        %824 = vmatprep.mubr.f32.mxu0 0.0
        %825 = vmatmul.mubr.f32.gmra.mrb[0].mxu0 %v758
        %v826 = vpop.f32.mrb[0].mxu0
        %v827 = vadd.f32 %v755, %v826
        %v828 = vpop.f32.mrb[0].mxu0
        %829 = vdwg.mxu0
        %v830 = vmul.f32 %v316, %v575
        %832 = vrot.lane.b32.xlu0 %v575, 1
        %v833 = vpop.permute.xlu0 %832
        %v835 = vmul.f32 %v316, %v833
        %v836 = vmul.f32 %v317, %v833
        %837 = vrot.lane.b32.xlu0 %v575, 2
        %v838 = vpop.permute.xlu0 %837
        %v840 = vmul.f32 %v316, %v838
        %v841 = vmul.f32 %v317, %v838
        %842 = vrot.lane.b32.xlu0 %v575, 3
        %v843 = vpop.permute.xlu0 %842
        %v845 = vmul.f32 %v316, %v843
        %v846 = vmul.f32 %v317, %v843
        %847 = vrot.lane.b32.xlu0 %v575, 4
        %v848 = vpop.permute.xlu0 %847
        %v850 = vmul.f32 %v316, %v848
        %v851 = vmul.f32 %v317, %v848
        %852 = vrot.lane.b32.xlu0 %v575, 5
        %v853 = vpop.permute.xlu0 %852
        %v855 = vmul.f32 %v316, %v853
        %v856 = vmul.f32 %v317, %v853
        %857 = vrot.lane.b32.xlu0 %v575, 6
        %v858 = vpop.permute.xlu0 %857
        %v860 = vmul.f32 %v316, %v858
        %v861 = vmul.f32 %v317, %v858
        %862 = vrot.lane.b32.xlu0 %v575, 7
        %v863 = vpop.permute.xlu0 %862
        %v865 = vmul.f32 %v316, %v863
        %v866 = vmul.f32 %v317, %v863
        %v867 = vmul.f32 %v536, %v833
        %v868 = vmul.f32 %v537, %v833
        %v869 = vsub.f32 0.0, %v867
        %v870 = vsub.f32 0.0, %v868
        %v871 = vmul.f32 %v548, %v575
        %v872 = vsub.f32 0.0, %v871
        %875 = vrot.lane.b32.xlu0 %v835, 127
        %v876 = vpop.permute.xlu0 %875
        %877 = vrot.lane.b32.xlu0 %v836, 127
        %v878 = vpop.permute.xlu0 %877
        %v879 = vsel %vm325, %v876, %v878
        %883 = vrot.lane.b32.xlu0 %v840, 126
        %v884 = vpop.permute.xlu0 %883
        %885 = vrot.lane.b32.xlu0 %v841, 126
        %v886 = vpop.permute.xlu0 %885
        %v887 = vsel %vm345, %v884, %v886
        %891 = vrot.lane.b32.xlu0 %v845, 125
        %v892 = vpop.permute.xlu0 %891
        %893 = vrot.lane.b32.xlu0 %v846, 125
        %v894 = vpop.permute.xlu0 %893
        %v895 = vsel %vm373, %v892, %v894
        %899 = vrot.lane.b32.xlu0 %v850, 124
        %v900 = vpop.permute.xlu0 %899
        %901 = vrot.lane.b32.xlu0 %v851, 124
        %v902 = vpop.permute.xlu0 %901
        %v903 = vsel %vm401, %v900, %v902
        %907 = vrot.lane.b32.xlu0 %v855, 123
        %v908 = vpop.permute.xlu0 %907
        %909 = vrot.lane.b32.xlu0 %v856, 123
        %v910 = vpop.permute.xlu0 %909
        %v911 = vsel %vm429, %v908, %v910
        %915 = vrot.lane.b32.xlu0 %v860, 122
        %v916 = vpop.permute.xlu0 %915
        %917 = vrot.lane.b32.xlu0 %v861, 122
        %v918 = vpop.permute.xlu0 %917
        %v919 = vsel %vm457, %v916, %v918
        %923 = vrot.lane.b32.xlu0 %v865, 121
        %v924 = vpop.permute.xlu0 %923
        %925 = vrot.lane.b32.xlu0 %v866, 121
        %v926 = vpop.permute.xlu0 %925
        %v927 = vsel %vm485, %v924, %v926
        %931 = vrot.lane.b32.xlu0 %v869, 127
        %v932 = vpop.permute.xlu0 %931
        %933 = vrot.lane.b32.xlu0 %v870, 127
        %v934 = vpop.permute.xlu0 %933
        %v935 = vsel %vm325, %v932, %v934
        %938 = vset.pattern.permute.xlu0 0
        %939 = vperm.xlu0 %938, %v579
        %v940 = vpop.permute.xlu0 %939
        %vm942 = vcmask 1040384
        %v943 = vrot.slane %v576, 7
        %v944 = vrot.slane %v577, 7
        %v945 = vsel %vm942, %v943, %v944
        %v946 = vrot.slane %v583, 7
        %v947 = vrot.slane %v940, 7
        %v948 = vsel %vm942, %v946, %v947
        %vm951 = vcmask 654336
        %v952 = vsel %vm951, %v945, 0
        %v954 = vsel %vm951, %v944, 0
        %956 = vmatprep.subr.mxu0 0.0
        %957 = vmatpush1.msra.mxu0 %v830
        %958 = vmatprep.subr.mxu0 0.0
        %959 = vmatpush1.msra.mxu0 %v879
        %960 = vmatprep.subr.mxu0 0.0
        %961 = vmatpush1.msra.mxu0 %v887
        %962 = vmatprep.subr.mxu0 0.0
        %963 = vmatpush1.msra.mxu0 %v895
        %964 = vmatprep.subr.mxu0 0.0
        %965 = vmatpush1.msra.mxu0 %v903
        %966 = vmatprep.subr.mxu0 0.0
        %967 = vmatpush1.msra.mxu0 %v911
        %968 = vmatprep.subr.mxu0 0.0
        %969 = vmatpush1.msra.mxu0 %v919
        %970 = vmatprep.subr.mxu0 0.0
        %971 = vmatpush1.msra.mxu0 %v927
        %972 = vmatprep.subr.mxu0 0.0
        %973 = vmatpush1.msra.mxu0 %v935
        %974 = vmatprep.subr.mxu0 0.0
        %975 = vmatpush1.msra.mxu0 %v872
        %976 = vmatprep.subr.mxu0 0.0
        %977 = vmatpush1.msra.mxu0 0.0
        %978 = vmatprep.subr.mxu0 0.0
        %979 = vmatpush1.msra.mxu0 0.0
        %980 = vmatprep.subr.mxu0 0.0
        %981 = vmatpush1.msra.mxu0 0.0
        %982 = vmatprep.subr.mxu0 0.0
        %983 = vmatpush1.msra.mxu0 0.0
        %984 = vmatprep.subr.mxu0 0.0
        %985 = vmatpush1.msra.mxu0 0.0
        %986 = vmatprep.subr.mxu0 0.0
        %987 = vmatpush1.msra.mxu0 0.0
        %988 = vmatprep.subr.mxu0 0.0
        %989 = vmatpush1.msra.mxu0 0.0
        %990 = vmatprep.subr.mxu0 0.0
        %991 = vmatpush1.msra.mxu0 0.0
        %992 = vmatprep.subr.mxu0 0.0
        %993 = vmatpush1.msra.mxu0 0.0
        %994 = vmatprep.subr.mxu0 0.0
        %995 = vmatpush1.msra.mxu0 0.0
        %996 = vmatprep.subr.mxu0 0.0
        %997 = vmatpush1.msra.mxu0 0.0
        %998 = vmatprep.subr.mxu0 0.0
        %999 = vmatpush1.msra.mxu0 0.0
        %1000 = vmatprep.subr.mxu0 0.0
        %1001 = vmatpush1.msra.mxu0 0.0
        %1002 = vmatprep.subr.mxu0 0.0
        %1003 = vmatpush1.msra.mxu0 0.0
        %1004 = vmatprep.subr.mxu0 0.0
        %1005 = vmatpush1.msra.mxu0 0.0
        %1006 = vmatprep.subr.mxu0 0.0
        %1007 = vmatpush1.msra.mxu0 0.0
        %1008 = vmatprep.subr.mxu0 0.0
        %1009 = vmatpush1.msra.mxu0 0.0
        %1010 = vmatprep.subr.mxu0 0.0
        %1011 = vmatpush1.msra.mxu0 0.0
        %1012 = vmatprep.subr.mxu0 0.0
        %1013 = vmatpush1.msra.mxu0 0.0
        %1014 = vmatprep.subr.mxu0 0.0
        %1015 = vmatpush1.msra.mxu0 0.0
        %1016 = vmatprep.subr.mxu0 0.0
        %1017 = vmatpush1.msra.mxu0 0.0
        %1018 = vmatprep.subr.mxu0 0.0
        %1019 = vmatpush1.msra.mxu0 0.0
        %1020 = vmatprep.mubr.f32.mxu0 0.0
        %1021 = vmatmul.mubr.f32.gmra.mrb[0].mxu0 %v952
        %v1022 = vpop.f32.mrb[0].mxu0
        %v1023 = vadd.f32 %v948, %v1022
        %v1024 = vpop.f32.mrb[0].mxu0
        %1025 = vmatprep.mubr.f32.mxu0 0.0
        %1026 = vmatmul.mubr.f32.gmra.mrb[0].mxu0 %v954
        %v1027 = vpop.f32.mrb[0].mxu0
        %v1028 = vadd.f32 %v947, %v1027
        %v1029 = vpop.f32.mrb[0].mxu0
        %1030 = vdwg.mxu0
        %v1032 = vrot.slane %v827, 5
        %vm1036 = vcmask 1046528
        %v1037 = vrot.slane %v1023, 1
        %v1038 = vrot.slane %v1028, 1
        %v1039 = vsel %vm1036, %v1037, %v1038
        %vm1042 = vcmask 1042432
        %v1043 = vsel %vm1042, %v656, %v1032
        %v1044 = vsel %vm1036, %v1043, %v1037
        %1045 = vst [vmem:[%s307] sm:$0xff] %v1044
        %1046 = vst [vmem:[%s307 + $0x8] sm:$0xff] %v1039
        %1049 = vrot.lane.b32.xlu0 %v536, 127
        %v1050 = vpop.permute.xlu0 %1049
        %1051 = vrot.lane.b32.xlu0 %v537, 127
        %v1052 = vpop.permute.xlu0 %1051
        %v1053 = vsel %vm325, %v1050, %v1052
        %1055 = vst [vmem:[%s314] sm:$0xff] %v521
        %1056 = vst [vmem:[%s314 + $0x8] sm:$0xff] %v509
        %1057 = vst [vmem:[%s314 + $0x10] sm:$0xff] %v570
        %1058 = vst [vmem:[%s314 + $0x18] sm:$0xff] %v1053
        %1059 = vst [vmem:[%s314 + $0x20] sm:$0xff] %v548
        %s1060 = sand.u32 %s151, 1
        %s1061 = scalar_lea.sflag [#allocation4], %s1060
        %s1062 = sand.u32 %s151, 1
        %s1063 = smul.addr %s1062, 16
        %s1064 = scalar_lea.vmem [#allocation7], %s1063
        %s1065 = sand.u32 %s179, 1
        %s1066 = scalar_lea.sflag [#allocation9], %s1065
        %s1067 = sand.u32 %s179, 1
        %s1068 = smul.addr %s1067, 40
        %s1069 = scalar_lea.vmem [#allocation8], %s1068
        // Predicated region
        $region45: #{tpu_custom_call.1} parent=35 // pred_check
          %p1070 = pneg %p161
        $region46: #{tpu_custom_call.1} parent=35 // pred_check_branch
          %1072 = sbr.rel (%p1070) target = $region48
        $region47: #{tpu_custom_call.1} parent=35 // pred_region
          %s1074 = ssub.s32 256, 256
          %1075 = vsyncadd %s1061, %s1074
          %s1076 = smul.addr %s33, 2
          %s1077 = sadd.s32 %s34, %s1076
          %s1078 = smul.addr %s1077, 128
          %s1079 = scalar_lea.hbm %s4, %s1078
          %s1080 = sshll.u32 %s1064, 4
          %s1081 = int_to_ptr.vmem [resolvable:$true] %s1080
          %1086 = dma.vmem_to_hbm [thread:$0]  %s1081, 256, %s1079, %s1061, 128, 128, 8
        $region48: #{tpu_custom_call.1} parent=35 // pred_fallthru
          _
        // Predicated region
        $region49: #{tpu_custom_call.1} parent=35 // pred_check
          %p1087 = pneg %p189
        $region50: #{tpu_custom_call.1} parent=35 // pred_check_branch
          %1089 = sbr.rel (%p1087) target = $region52
        $region51: #{tpu_custom_call.1} parent=35 // pred_region
          %s1091 = ssub.s32 640, 640
          %1092 = vsyncadd %s1066, %s1091
          %s1093 = smul.addr %s33, 5
          %s1094 = sadd.s32 %s34, %s1093
          %s1095 = smul.addr %s1094, 128
          %s1096 = scalar_lea.hbm %s5, %s1095
          %s1097 = sshll.u32 %s1069, 4
          %s1098 = int_to_ptr.vmem [resolvable:$true] %s1097
          %1103 = dma.vmem_to_hbm [thread:$0]  %s1098, 640, %s1096, %s1066, 128, 128, 8
        $region52: #{tpu_custom_call.1} parent=35 // pred_fallthru
          _
      $region36: #{tpu_custom_call.1} parent=5 // pred_fallthru
        _
      %p1104 = scmp.le.s32.totalorder 2, %s24
      // Predicated region
      $region53: #{tpu_custom_call.1} parent=5 // pred_check
        %p1105 = pneg %p1104
      $region54: #{tpu_custom_call.1} parent=5 // pred_check_branch
        %1107 = sbr.rel (%p1105) target = $region56
      $region55: #{tpu_custom_call.1} parent=5 // pred_region
        %s1108 = ssub.s32 %s24, 2
        // Predicated region
        $region57: #{tpu_custom_call.1} parent=55 // pred_check
          %p1109 = pneg %p167
        $region58: #{tpu_custom_call.1} parent=55 // pred_check_branch
          %1111 = sbr.rel (%p1109) target = $region60
        $region59: #{tpu_custom_call.1} parent=55 // pred_region
          %s1112 = sand.u32 %s152, 1
          %s1113 = scalar_lea.sflag [#allocation4], %s1112
          %s1114 = sand.u32 %s152, 1
          %s1115 = smul.addr %s1114, 16
          %s1116 = scalar_lea.vmem [#allocation7], %s1115
          %1117 = dma.done %s1113, 256
        $region60: #{tpu_custom_call.1} parent=55 // pred_fallthru
          _
        // Predicated region
        $region61: #{tpu_custom_call.1} parent=55 // pred_check
          %p1118 = pneg %p195
        $region62: #{tpu_custom_call.1} parent=55 // pred_check_branch
          %1120 = sbr.rel (%p1118) target = $region64
        $region63: #{tpu_custom_call.1} parent=55 // pred_region
          %s1121 = sand.u32 %s180, 1
          %s1122 = scalar_lea.sflag [#allocation9], %s1121
          %s1123 = sand.u32 %s180, 1
          %s1124 = smul.addr %s1123, 40
          %s1125 = scalar_lea.vmem [#allocation8], %s1124
          %1126 = dma.done %s1122, 640
        $region64: #{tpu_custom_call.1} parent=55 // pred_fallthru
          _
      $region56: #{tpu_custom_call.1} parent=5 // pred_fallthru
        _
    $region6: #{tpu_custom_call.1} parent=1 // loop_footer
      %s28 = sadd.s32 1, %s24
    $region7: #{tpu_custom_call.1} parent=1 // loop_footer_branch
      %23 = sbr.rel target = $region3
    $region8: #{tpu_custom_call.1} parent=1 // loop_exit
      _
    %1127 = vsyncpa [#allocation3], 1
    %s1128 = scalar_lea.sflag [#allocation3], 1
    %1129 = vsyncpa %s1128, 1
    %1130 = vsyncpa [#allocation6], 1
    %s1131 = scalar_lea.sflag [#allocation6], 1
    %1132 = vsyncpa %s1131, 1
    %1133 = vsyncpa [#allocation4], 1
    %s1134 = scalar_lea.sflag [#allocation4], 1
    %1135 = vsyncpa %s1134, 1
    %1136 = vsyncpa [#allocation9], 1
    %s1137 = scalar_lea.sflag [#allocation9], 1
    %1138 = vsyncpa %s1137, 1

</llo_original>
